<compile_context>
chip_gen: v6e
topology: v6e:2x2x1
jax: 0.10.0
libtpu: 0.0.40
codegen_flags: <defaults>
</compile_context>

<pallas_src>
import functools

import jax
import jax.numpy as jnp
from jax.experimental import pallas as pl
from jax.experimental.pallas import tpu as pltpu

LANE = 128  # TPU vreg lane width


def _siml_kernel(x_ref, wcat_ref, bcat_ref, w2_ref, b2_ref, o_ref, *, f_out):
    # x tile: (tn, f_in) f32 -> bf16 for the MXU (cast in-kernel, no host pad pass).
    x_bf = x_ref[...].astype(jnp.bfloat16)

    # Fused layer-1 + linear-shortcut matmul, f32 accumulate, biases as a broadcast row:
    #   cols [0:f_out)            = x @ Wsc + bsc   (shortcut, stays f32)
    #   cols [f_out:f_out+hidden) = x @ W1  + b1    (layer-1 pre-activation)
    #   cols [f_out+hidden:128)   = 0
    cat = jnp.dot(x_bf, wcat_ref[...], preferred_element_type=jnp.float32)
    cat = cat + bcat_ref[...]                                       # (tn, 128) f32

    # Layer-1 activation over the full 128-lane slab (no half-vreg lane slice
    # feeding the MXU); non-hidden lanes hit zero rows of W2 below.
    h = jnp.tanh(cat).astype(jnp.bfloat16)                          # (tn, 128) bf16

    # Layer 2 (identity pre-residual activation).  Real output lands on cols
    # [0:f_out), i.e. exactly on top of the shortcut lanes of `cat`.
    y = jnp.dot(h, w2_ref[...], preferred_element_type=jnp.float32) + b2_ref[...]

    # out = tanh(h2) + shortcut; store only the real f_out columns.
    o_ref[...] = (jnp.tanh(y) + cat)[:, :f_out].astype(o_ref.dtype)


def pack_siml_params(w1, b1, w2, b2, wsc, bsc):
    """Pack SimlModule parameters into lane-dense, MXU-friendly slabs.

    Call ONCE at parameter-load/init time (not per forward call) — these are a
    handful of small XLA ops that would otherwise dominate a microsecond-scale
    forward.
    """
    f_in, hidden = w1.shape
    f_out = w2.shape[1]
    assert f_out + hidden <= LANE, "fused [Wsc | W1] must fit in one lane slab"
    cdt = jnp.bfloat16

    # Fused first-stage weight: [Wsc | W1 | 0] over 128 output lanes.
    wcat = jnp.zeros((f_in, LANE), cdt)
    wcat = wcat.at[:, :f_out].set(wsc.astype(cdt))
    wcat = wcat.at[:, f_out:f_out + hidden].set(w1.astype(cdt))
    bcat = jnp.zeros((1, LANE), jnp.float32)
    bcat = bcat.at[0, :f_out].set(bsc.reshape(-1).astype(jnp.float32))
    bcat = bcat.at[0, f_out:f_out + hidden].set(b1.reshape(-1).astype(jnp.float32))

    # Layer-2 weight padded to a full 128x128 slab: real rows at
    # [f_out:f_out+hidden) (the layer-1 lanes of `cat`), real cols at [0:f_out)
    # (on top of the shortcut lanes).  Zero rows kill the tanh'd shortcut lanes.
    w2p = jnp.zeros((LANE, LANE), cdt)
    w2p = w2p.at[f_out:f_out + hidden, :f_out].set(w2.astype(cdt))
    b2p = jnp.zeros((1, LANE), jnp.float32)
    b2p = b2p.at[0, :f_out].set(b2.reshape(-1).astype(jnp.float32))

    return wcat, bcat, w2p, b2p


def siml_block_forward(x, wcat, bcat, w2p, b2p, *, f_out, tn=256):
    """Fused forward: tanh(tanh(x@W1+b1)@W2+b2) + (x@Wsc+bsc).

    tn: rows per grid step.  Pick it so each TensorCore sees several pipeline
    steps (>= 3-4); for large N it may grow to 4-8K rows (VMEM is not the
    constraint, even on v7x's 64 MiB).
    """
    N, f_in = x.shape
    assert wcat.shape == (f_in, LANE)

    n_pad = pl.cdiv(N, tn) * tn
    if n_pad != N:
        x = jnp.pad(x, ((0, n_pad - N), (0, 0)))

    grid = (n_pad // tn,)
    const = lambda i: (0, 0)

    out = pl.pallas_call(
        functools.partial(_siml_kernel, f_out=f_out),
        out_shape=jax.ShapeDtypeStruct((n_pad, f_out), jnp.float32),
        grid_spec=pltpu.PrefetchScalarGridSpec(
            num_scalar_prefetch=0,
            grid=grid,
            in_specs=[
                pl.BlockSpec((tn, f_in), lambda i: (i, 0)),  # x tile (unpadded f32)
                # Constant-index weight/bias specs never re-DMA across steps.
                pl.BlockSpec((f_in, LANE), const),           # [Wsc | W1]      bf16
                pl.BlockSpec((1, LANE), const),              # [bsc | b1]      f32
                pl.BlockSpec((LANE, LANE), const),           # W2 padded slab  bf16
                pl.BlockSpec((1, LANE), const),              # b2 padded row   f32
            ],
            out_specs=pl.BlockSpec((tn, f_out), lambda i: (i, 0)),
        ),
        compiler_params=pltpu.CompilerParams(
            dimension_semantics=("parallel",),  # row tiles shard across TensorCores
        ),
    )(x, wcat, bcat, w2p, b2p)

    if n_pad != N:
        out = out[:N]
    return out


def reference_forward(x, w1, b1, w2, b2, wsc, bsc):
    h = jnp.tanh(x @ w1 + b1)
    h = h @ w2 + b2
    return jnp.tanh(h) + (x @ wsc + bsc)


def matched_reference(x, w1, b1, w2, b2, wsc, bsc):
    """Reference mirroring the kernel's exact bf16 quantization points."""
    bf = lambda a: a.astype(jnp.bfloat16)
    xb = bf(x)
    sc = jnp.dot(xb, bf(wsc), preferred_element_type=jnp.float32) + bsc.astype(jnp.float32)
    c1 = jnp.dot(xb, bf(w1), preferred_element_type=jnp.float32) + b1.astype(jnp.float32)
    h = jnp.tanh(c1).astype(jnp.bfloat16)
    y = jnp.dot(h, bf(w2), preferred_element_type=jnp.float32) + b2.astype(jnp.float32)
    return jnp.tanh(y) + sc


if __name__ == "__main__":
    # Small shapes consistent with a siml block: N graph vertices x F features.
    N, F_IN, HIDDEN, F_OUT = 2048, 16, 64, 32
    TN = 256  # grid = 8 steps -> >= 4 pipeline steps per TensorCore on v7x

    key = jax.random.PRNGKey(0)
    kx, k1, kb1, k2, kb2, ks, kbs = jax.random.split(key, 7)

    x = jax.random.normal(kx, (N, F_IN), dtype=jnp.float32)

    # Deterministic parameter init (roughly torch.nn.Linear's uniform scale).
    def init_w(k, shape, fan_in):
        bound = 1.0 / (fan_in ** 0.5)
        return jax.random.uniform(k, shape, jnp.float32, -bound, bound)

    w1 = init_w(k1, (F_IN, HIDDEN), F_IN)
    b1 = init_w(kb1, (1, HIDDEN), F_IN)
    w2 = init_w(k2, (HIDDEN, F_OUT), HIDDEN)
    b2 = init_w(kb2, (1, F_OUT), HIDDEN)
    wsc = init_w(ks, (F_IN, F_OUT), F_IN)     # linear residual shortcut
    bsc = init_w(kbs, (1, F_OUT), F_IN)

    # Pack once at "init"; reuse across all forward calls.
    packed = pack_siml_params(w1, b1, w2, b2, wsc, bsc)
    packed = jax.block_until_ready(packed)
    wcat, bcat, w2p, b2p = packed

    fwd = jax.jit(functools.partial(siml_block_forward, f_out=F_OUT, tn=TN))
    out = jax.block_until_ready(fwd(x, wcat, bcat, w2p, b2p))
    assert out.shape == (N, F_OUT)

    # Tight check against a cast-matched reference (same bf16 quantization).
    ref_m = matched_reference(x, w1, b1, w2, b2, wsc, bsc)
    assert jnp.allclose(out, ref_m, atol=2e-3, rtol=2e-3), (
        float(jnp.max(jnp.abs(out - ref_m))))

    # Loose sanity check against the pure-f32 reference (bf16 input rounding).
    ref32 = reference_forward(x, w1, b1, w2, b2, wsc, bsc)
    assert jnp.allclose(out, ref32, atol=1.5e-1, rtol=0), (
        float(jnp.max(jnp.abs(out - ref32))))

    print("KERNEL_OK")
</pallas_src>

<mosaic_0001>
module attributes {stable_mosaic.version = 11 : i64} {
  func.func @_siml_kernel(%arg0: i32, %arg1: memref<256x16xf32, #tpu.memory_space<vmem>>, %arg2: memref<16x128xbf16, #tpu.memory_space<vmem>>, %arg3: memref<1x128xf32, #tpu.memory_space<vmem>>, %arg4: memref<128x128xbf16, #tpu.memory_space<vmem>>, %arg5: memref<1x128xf32, #tpu.memory_space<vmem>>, %arg6: memref<256x32xf32, #tpu.memory_space<vmem>>) attributes {dimension_semantics = [#tpu.dimension_semantics<parallel>], iteration_bounds = array<i64: 8>, scalar_prefetch = 0 : i64, scratch_operands = 0 : i64, tpu.core_type = #tpu.core_type<tc>, window_params = [{transform_indices = @transform_0, window_bounds = array<i64: 256, 16>}, {pipeline_mode = #tpu.pipeline_mode<synchronous>, transform_indices = @transform_1, window_bounds = array<i64: 16, 128>}, {pipeline_mode = #tpu.pipeline_mode<synchronous>, transform_indices = @transform_2, window_bounds = array<i64: 1, 128>}, {pipeline_mode = #tpu.pipeline_mode<synchronous>, transform_indices = @transform_3, window_bounds = array<i64: 128, 128>}, {pipeline_mode = #tpu.pipeline_mode<synchronous>, transform_indices = @transform_4, window_bounds = array<i64: 1, 128>}, {transform_indices = @transform_5, window_bounds = array<i64: 256, 32>}]} {
    %c0 = arith.constant 0 : index
    %c0_0 = arith.constant 0 : index
    %0 = vector.load %arg1[%c0, %c0_0] : memref<256x16xf32, #tpu.memory_space<vmem>>, vector<256x16xf32>
    %1 = arith.truncf %0 : vector<256x16xf32> to vector<256x16xbf16>
    %c0_1 = arith.constant 0 : index
    %c0_2 = arith.constant 0 : index
    %2 = vector.load %arg2[%c0_1, %c0_2] : memref<16x128xbf16, #tpu.memory_space<vmem>>, vector<16x128xbf16>
    %cst = arith.constant dense<0.000000e+00> : vector<256x128xf32>
    %3 = tpu.matmul %1, %2, %cst {dimension_numbers = #tpu.dot_dimension_numbers<[1], [0], [0], [1], [0, 0, 1, 1], [], []>} : vector<256x16xbf16>, vector<16x128xbf16>, vector<256x128xf32> -> vector<256x128xf32>
    %c0_3 = arith.constant 0 : index
    %c0_4 = arith.constant 0 : index
    %4 = vector.load %arg3[%c0_3, %c0_4] : memref<1x128xf32, #tpu.memory_space<vmem>>, vector<1x128xf32>
    %5 = vector.broadcast %4 : vector<1x128xf32> to vector<256x128xf32>
    %6 = arith.addf %3, %5 : vector<256x128xf32>
    %7 = math.tanh %6 : vector<256x128xf32>
    %8 = arith.truncf %7 : vector<256x128xf32> to vector<256x128xbf16>
    %c0_5 = arith.constant 0 : index
    %c0_6 = arith.constant 0 : index
    %9 = vector.load %arg4[%c0_5, %c0_6] : memref<128x128xbf16, #tpu.memory_space<vmem>>, vector<128x128xbf16>
    %cst_7 = arith.constant dense<0.000000e+00> : vector<256x128xf32>
    %10 = tpu.matmul %8, %9, %cst_7 {dimension_numbers = #tpu.dot_dimension_numbers<[1], [0], [0], [1], [0, 0, 1, 1], [], []>} : vector<256x128xbf16>, vector<128x128xbf16>, vector<256x128xf32> -> vector<256x128xf32>
    %c0_8 = arith.constant 0 : index
    %c0_9 = arith.constant 0 : index
    %11 = vector.load %arg5[%c0_8, %c0_9] : memref<1x128xf32, #tpu.memory_space<vmem>>, vector<1x128xf32>
    %12 = vector.broadcast %11 : vector<1x128xf32> to vector<256x128xf32>
    %13 = arith.addf %10, %12 : vector<256x128xf32>
    %14 = math.tanh %13 : vector<256x128xf32>
    %15 = arith.addf %14, %6 : vector<256x128xf32>
    %16 = vector.extract_strided_slice %15 {offsets = [0, 0], sizes = [256, 32], strides = [1, 1]} : vector<256x128xf32> to vector<256x32xf32>
    %c0_10 = arith.constant 0 : index
    %c0_11 = arith.constant 0 : index
    %17 = vector.load %arg6[%c0_10, %c0_11] : memref<256x32xf32, #tpu.memory_space<vmem>>, vector<256x32xf32>
    tpu.vector_store %arg6[%c0_10, %c0_11], %16 {strides = array<i32>} : memref<256x32xf32, #tpu.memory_space<vmem>>, vector<256x32xf32>,
    return
  }
  func.func @transform_0(%arg0: i32) -> (i32, i32) {
    %c0_i32 = arith.constant 0 : i32
    %c0_i32_0 = arith.constant 0 : i32
    return %arg0, %c0_i32 : i32, i32
  }
  func.func @transform_1(%arg0: i32) -> (i32, i32) {
    %c0_i32 = arith.constant 0 : i32
    %c0_i32_0 = arith.constant 0 : i32
    %c0_i32_1 = arith.constant 0 : i32
    return %c0_i32, %c0_i32_0 : i32, i32
  }
  func.func @transform_2(%arg0: i32) -> (i32, i32) {
    %c0_i32 = arith.constant 0 : i32
    %c0_i32_0 = arith.constant 0 : i32
    %c0_i32_1 = arith.constant 0 : i32
    return %c0_i32, %c0_i32_0 : i32, i32
  }
  func.func @transform_3(%arg0: i32) -> (i32, i32) {
    %c0_i32 = arith.constant 0 : i32
    %c0_i32_0 = arith.constant 0 : i32
    %c0_i32_1 = arith.constant 0 : i32
    return %c0_i32, %c0_i32_0 : i32, i32
  }
  func.func @transform_4(%arg0: i32) -> (i32, i32) {
    %c0_i32 = arith.constant 0 : i32
    %c0_i32_0 = arith.constant 0 : i32
    %c0_i32_1 = arith.constant 0 : i32
    return %c0_i32, %c0_i32_0 : i32, i32
  }
  func.func @transform_5(%arg0: i32) -> (i32, i32) {
    %c0_i32 = arith.constant 0 : i32
    %c0_i32_0 = arith.constant 0 : i32
    return %arg0, %c0_i32 : i32, i32
  }
}

</mosaic_0001>

<llo_original>
// kernel: siml_block_forward.1
$region0: #{siml_block_forward.1}
  #allocation0 [shape = 'u32[]', space=smem, size = 0x4, offset = 0x4, fixed_abs, tag = 'smem constant byte address 0x4 - core index']
  #allocation1 [shape = 'u32[144,128]{1,0:T(1,128)}', space=vmem, size = 0x12000, scoped, tag = 'internal scratch']
  %s0 = inlined_call_operand.vmem [shape: f32[2048,16], index: 0, kind: input, shape index: {}]
  %s1 = inlined_call_operand.vmem [shape: bf16[16,128], index: 1, kind: input, shape index: {}]
  %s2 = inlined_call_operand.vmem [shape: f32[1,128], index: 2, kind: input, shape index: {}]
  %s3 = inlined_call_operand.vmem [shape: bf16[128,128], index: 3, kind: input, shape index: {}]
  %s4 = inlined_call_operand.vmem [shape: f32[1,128], index: 4, kind: input, shape index: {}]
  %s5 = inlined_call_operand.vmem [shape: f32[2048,32], index: 5, kind: output, shape index: {}]
  %s6 = sld [smem:[#allocation0]]
  $region53: #{siml_block_forward.1} parent=0
    _
  %s8 = ssub.s32 1, %s6
  %s9 = scalar_select 0, %s8, %s6
  loop: start=0, step=1, limit=10
  $region2: #{siml_block_forward.1} parent=0 // loop_pre_header
    _
  $region3: #{siml_block_forward.1} parent=0 // loop_header
    %s11 = sphi 0, %s15
    %p12 = scmp.ge.s32.totalorder %s11, 10
    %s21 = sphi 0, %s23
    %s24 = sphi 0, %s21
    %s25 = sphi 0, %s24
    %s41 = sphi 0, %s25
    %s45 = sphi 0, %s45
    %s47 = sphi 0, %s45
    %s48 = sphi 0, %s47
    %s62 = sphi 0, %s48
    %s66 = sphi 0, %s66
    %s68 = sphi 0, %s66
    %s69 = sphi 0, %s68
    %s83 = sphi 0, %s69
    %s87 = sphi 0, %s87
    %s89 = sphi 0, %s87
    %s90 = sphi 0, %s89
    %s104 = sphi 0, %s90
    %s108 = sphi 0, %s108
    %s110 = sphi 0, %s108
    %s111 = sphi 0, %s110
    %s125 = sphi 0, %s111
    %s131 = sphi 0, %s133
    %s134 = sphi 0, %s131
    %s135 = sphi 0, %s134
    %s151 = sphi 0, %s135
  $region4: #{siml_block_forward.1} parent=0 // loop_header_branch
    %14 = sbr.rel (%p12) target = $region8
  $region5: #{siml_block_forward.1} parent=0 // loop_body
    %s16 = ssub.s32 %s11, 1
    %s17 = ssub.s32 %s11, 2
    %s18 = sadd.s32 %s11, 1
    %s19 = ssub.s32 %s11, %s18
    %p20 = scmp.eq.s32.totalorder %s19, 0
    %s22 = sadd.s32 %s21, 1
    %s23 = scalar_select %p20, %s21, %s22
    %p26 = pneg %p20
    %p27 = scmp.eq.s32.totalorder %s11, 7
    %p28 = por %p26, %p27
    %p29 = scmp.ne.s32.totalorder %s21, %s24
    %p30 = scmp.eq.s32.totalorder %s11, 0
    %p31 = por %p29, %p30
    %p32 = scmp.ne.s32.totalorder %s21, %s24
    %p33 = scmp.eq.s32.totalorder %s16, 7
    %p34 = por %p32, %p33
    %p35 = scmp.ne.s32.totalorder %s24, %s25
    %p36 = scmp.eq.s32.totalorder %s16, 0
    %p37 = por %p35, %p36
    %p38 = scmp.ne.s32.totalorder %s24, %s25
    %p39 = scmp.eq.s32.totalorder %s17, 7
    %p40 = por %p38, %p39
    %p42 = scmp.ne.s32.totalorder %s25, %s41
    %p43 = scmp.eq.s32.totalorder %s17, 0
    %p44 = por %p42, %p43
    %s46 = sadd.s32 %s45, 1
    %p49 = scmp.eq.s32.totalorder %s11, 7
    %p50 = scmp.ne.s32.totalorder %s45, %s47
    %p51 = scmp.eq.s32.totalorder %s11, 0
    %p52 = por %p50, %p51
    %p53 = scmp.ne.s32.totalorder %s45, %s47
    %p54 = scmp.eq.s32.totalorder %s16, 7
    %p55 = por %p53, %p54
    %p56 = scmp.ne.s32.totalorder %s47, %s48
    %p57 = scmp.eq.s32.totalorder %s16, 0
    %p58 = por %p56, %p57
    %p59 = scmp.ne.s32.totalorder %s47, %s48
    %p60 = scmp.eq.s32.totalorder %s17, 7
    %p61 = por %p59, %p60
    %p63 = scmp.ne.s32.totalorder %s48, %s62
    %p64 = scmp.eq.s32.totalorder %s17, 0
    %p65 = por %p63, %p64
    %s67 = sadd.s32 %s66, 1
    %p70 = scmp.eq.s32.totalorder %s11, 7
    %p71 = scmp.ne.s32.totalorder %s66, %s68
    %p72 = scmp.eq.s32.totalorder %s11, 0
    %p73 = por %p71, %p72
    %p74 = scmp.ne.s32.totalorder %s66, %s68
    %p75 = scmp.eq.s32.totalorder %s16, 7
    %p76 = por %p74, %p75
    %p77 = scmp.ne.s32.totalorder %s68, %s69
    %p78 = scmp.eq.s32.totalorder %s16, 0
    %p79 = por %p77, %p78
    %p80 = scmp.ne.s32.totalorder %s68, %s69
    %p81 = scmp.eq.s32.totalorder %s17, 7
    %p82 = por %p80, %p81
    %p84 = scmp.ne.s32.totalorder %s69, %s83
    %p85 = scmp.eq.s32.totalorder %s17, 0
    %p86 = por %p84, %p85
    %s88 = sadd.s32 %s87, 1
    %p91 = scmp.eq.s32.totalorder %s11, 7
    %p92 = scmp.ne.s32.totalorder %s87, %s89
    %p93 = scmp.eq.s32.totalorder %s11, 0
    %p94 = por %p92, %p93
    %p95 = scmp.ne.s32.totalorder %s87, %s89
    %p96 = scmp.eq.s32.totalorder %s16, 7
    %p97 = por %p95, %p96
    %p98 = scmp.ne.s32.totalorder %s89, %s90
    %p99 = scmp.eq.s32.totalorder %s16, 0
    %p100 = por %p98, %p99
    %p101 = scmp.ne.s32.totalorder %s89, %s90
    %p102 = scmp.eq.s32.totalorder %s17, 7
    %p103 = por %p101, %p102
    %p105 = scmp.ne.s32.totalorder %s90, %s104
    %p106 = scmp.eq.s32.totalorder %s17, 0
    %p107 = por %p105, %p106
    %s109 = sadd.s32 %s108, 1
    %p112 = scmp.eq.s32.totalorder %s11, 7
    %p113 = scmp.ne.s32.totalorder %s108, %s110
    %p114 = scmp.eq.s32.totalorder %s11, 0
    %p115 = por %p113, %p114
    %p116 = scmp.ne.s32.totalorder %s108, %s110
    %p117 = scmp.eq.s32.totalorder %s16, 7
    %p118 = por %p116, %p117
    %p119 = scmp.ne.s32.totalorder %s110, %s111
    %p120 = scmp.eq.s32.totalorder %s16, 0
    %p121 = por %p119, %p120
    %p122 = scmp.ne.s32.totalorder %s110, %s111
    %p123 = scmp.eq.s32.totalorder %s17, 7
    %p124 = por %p122, %p123
    %p126 = scmp.ne.s32.totalorder %s111, %s125
    %p127 = scmp.eq.s32.totalorder %s17, 0
    %p128 = por %p126, %p127
    %s129 = ssub.s32 %s11, %s18
    %p130 = scmp.eq.s32.totalorder %s129, 0
    %s132 = sadd.s32 %s131, 1
    %s133 = scalar_select %p130, %s131, %s132
    %p136 = pneg %p130
    %p137 = scmp.eq.s32.totalorder %s11, 7
    %p138 = por %p136, %p137
    %p139 = scmp.ne.s32.totalorder %s131, %s134
    %p140 = scmp.eq.s32.totalorder %s11, 0
    %p141 = por %p139, %p140
    %p142 = scmp.ne.s32.totalorder %s131, %s134
    %p143 = scmp.eq.s32.totalorder %s16, 7
    %p144 = por %p142, %p143
    %p145 = scmp.ne.s32.totalorder %s134, %s135
    %p146 = scmp.eq.s32.totalorder %s16, 0
    %p147 = por %p145, %p146
    %p148 = scmp.ne.s32.totalorder %s134, %s135
    %p149 = scmp.eq.s32.totalorder %s17, 7
    %p150 = por %p148, %p149
    %p152 = scmp.ne.s32.totalorder %s135, %s151
    %p153 = scmp.eq.s32.totalorder %s17, 0
    %p154 = por %p152, %p153
    %p155 = scmp.le.s32.totalorder 1, %s11
    %p156 = scmp.lt.s32.totalorder %s11, 9
    %p157 = pnand %p155, %p156
    %p158 = pneg %p157
    // Predicated region
    $region9: #{siml_block_forward.1} parent=5 // pred_check
      _
    $region10: #{siml_block_forward.1} parent=5 // pred_check_branch
      %160 = sbr.rel (%p157) target = $region12
    $region11: #{siml_block_forward.1} parent=5 // pred_region
      %s161 = ssub.s32 %s11, 1
      // Predicated region
      $region13: #{siml_block_forward.1} parent=11 // pred_check
        %p162 = pneg %p58
      $region14: #{siml_block_forward.1} parent=11 // pred_check_branch
        %164 = sbr.rel (%p162) target = $region16
      $region15: #{siml_block_forward.1} parent=11 // pred_region
        _
      $region16: #{siml_block_forward.1} parent=11 // pred_fallthru
        _
      // Predicated region
      $region17: #{siml_block_forward.1} parent=11 // pred_check
        %p165 = pneg %p79
      $region18: #{siml_block_forward.1} parent=11 // pred_check_branch
        %167 = sbr.rel (%p165) target = $region20
      $region19: #{siml_block_forward.1} parent=11 // pred_region
        _
      $region20: #{siml_block_forward.1} parent=11 // pred_fallthru
        _
      // Predicated region
      $region21: #{siml_block_forward.1} parent=11 // pred_check
        %p168 = pneg %p100
      $region22: #{siml_block_forward.1} parent=11 // pred_check_branch
        %170 = sbr.rel (%p168) target = $region24
      $region23: #{siml_block_forward.1} parent=11 // pred_region
        _
      $region24: #{siml_block_forward.1} parent=11 // pred_fallthru
        _
      // Predicated region
      $region25: #{siml_block_forward.1} parent=11 // pred_check
        %p171 = pneg %p121
      $region26: #{siml_block_forward.1} parent=11 // pred_check_branch
        %173 = sbr.rel (%p171) target = $region28
      $region27: #{siml_block_forward.1} parent=11 // pred_region
        _
      $region28: #{siml_block_forward.1} parent=11 // pred_fallthru
        _
    $region12: #{siml_block_forward.1} parent=5 // pred_fallthru
      _
    %p174 = scmp.lt.s32.totalorder %s11, 8
    // Predicated region
    $region29: #{siml_block_forward.1} parent=5 // pred_check
      %p175 = pneg %p174
    $region30: #{siml_block_forward.1} parent=5 // pred_check_branch
      %177 = sbr.rel (%p175) target = $region32
    $region31: #{siml_block_forward.1} parent=5 // pred_region
      // Predicated region
      $region33: #{siml_block_forward.1} parent=31 // pred_check
        %p178 = pneg %p31
      $region34: #{siml_block_forward.1} parent=31 // pred_check_branch
        %180 = sbr.rel (%p178) target = $region36
      $region35: #{siml_block_forward.1} parent=31 // pred_region
        %s181 = smul.u32 32, %s11
        %p182 = scmp.lt.s32.totalorder %s181, 255
        %s183 = scalar_select %p182, %s181, 255
        %s184 = smul.addr %s183, 8
        %s185 = scalar_lea.vmem %s0, %s184
        %s186 = smul.u32 32, %s11
      $region36: #{siml_block_forward.1} parent=31 // pred_fallthru
        _
    $region32: #{siml_block_forward.1} parent=5 // pred_fallthru
      _
    %p187 = scmp.le.s32.totalorder 1, %s11
    %p188 = scmp.lt.s32.totalorder %s11, 9
    %p189 = pnand %p187, %p188
    %p190 = pneg %p189
    // Predicated region
    $region37: #{siml_block_forward.1} parent=5 // pred_check
      _
    $region38: #{siml_block_forward.1} parent=5 // pred_check_branch
      %192 = sbr.rel (%p189) target = $region40
    $region39: #{siml_block_forward.1} parent=5 // pred_region
      %s193 = ssub.s32 %s11, 1
      %s194 = smul.u32 32, %s16
      %p195 = scmp.lt.s32.totalorder %s194, 255
      %s196 = scalar_select %p195, %s194, 255
      %s197 = smul.addr %s196, 8
      %s198 = scalar_lea.vmem %s0, %s197
      %p199 = pneg %p37
      %p200 = pneg %p34
      %p201 = pneg %p58
      %p202 = pneg %p55
      %p203 = pneg %p79
      %p204 = pneg %p76
      %p205 = pneg %p100
      %p206 = pneg %p97
      %p207 = pneg %p121
      %p208 = pneg %p118
      %p209 = pneg %p147
      %p210 = pneg %p144
      %s211 = smul.u32 32, %s16
      %p212 = scmp.lt.s32.totalorder %s211, 255
      %s213 = scalar_select %p212, %s211, 255
      %s214 = smul.addr %s213, 8
      %s215 = scalar_lea.vmem %s5, %s214
      %s216 = smul.u32 32, %s16
      %p217 = scmp.lt.s32.totalorder %s216, 255
      %s218 = scalar_select %p217, %s216, 255
      %s219 = smul.addr %s218, 8
      %s220 = scalar_lea.vmem %s0, %s219
      %s221 = smul.u32 32, %s16
      %s222 = smul.u32 32, %s16
      %p223 = scmp.lt.s32.totalorder %s222, 255
      %s224 = scalar_select %p223, %s222, 255
      %s225 = smul.addr %s224, 8
      %s226 = scalar_lea.vmem %s5, %s225
      %s227 = smul.u32 32, %s16
      %v229 = vld [vmem:[%s220] sm:$0xff]
      %v230 = vld [vmem:[%s220 + $0x8] sm:$0xff]
      %v231 = vld [vmem:[%s220 + $0x10] sm:$0xff]
      %v232 = vld [vmem:[%s220 + $0x18] sm:$0xff]
      %v233 = vld [vmem:[%s220 + $0x20] sm:$0xff]
      %v234 = vld [vmem:[%s220 + $0x28] sm:$0xff]
      %v235 = vld [vmem:[%s220 + $0x30] sm:$0xff]
      %v236 = vld [vmem:[%s220 + $0x38] sm:$0xff]
      %v237 = vld [vmem:[%s220 + $0x40] sm:$0xff]
      %v238 = vld [vmem:[%s220 + $0x48] sm:$0xff]
      %v239 = vld [vmem:[%s220 + $0x50] sm:$0xff]
      %v240 = vld [vmem:[%s220 + $0x58] sm:$0xff]
      %v241 = vld [vmem:[%s220 + $0x60] sm:$0xff]
      %v242 = vld [vmem:[%s220 + $0x68] sm:$0xff]
      %v243 = vld [vmem:[%s220 + $0x70] sm:$0xff]
      %v244 = vld [vmem:[%s220 + $0x78] sm:$0xff]
      %v245 = vld [vmem:[%s220 + $0x80] sm:$0xff]
      %v246 = vld [vmem:[%s220 + $0x88] sm:$0xff]
      %v247 = vld [vmem:[%s220 + $0x90] sm:$0xff]
      %v248 = vld [vmem:[%s220 + $0x98] sm:$0xff]
      %v249 = vld [vmem:[%s220 + $0xa0] sm:$0xff]
      %v250 = vld [vmem:[%s220 + $0xa8] sm:$0xff]
      %v251 = vld [vmem:[%s220 + $0xb0] sm:$0xff]
      %v252 = vld [vmem:[%s220 + $0xb8] sm:$0xff]
      %v253 = vld [vmem:[%s220 + $0xc0] sm:$0xff]
      %v254 = vld [vmem:[%s220 + $0xc8] sm:$0xff]
      %v255 = vld [vmem:[%s220 + $0xd0] sm:$0xff]
      %v256 = vld [vmem:[%s220 + $0xd8] sm:$0xff]
      %v257 = vld [vmem:[%s220 + $0xe0] sm:$0xff]
      %v258 = vld [vmem:[%s220 + $0xe8] sm:$0xff]
      %v259 = vld [vmem:[%s220 + $0xf0] sm:$0xff]
      %v260 = vld [vmem:[%s220 + $0xf8] sm:$0xff]
      %v261 = vpack.c.bf16 %v230, %v229
      %v262 = vpack.c.bf16 %v232, %v231
      %v263 = vpack.c.bf16 %v234, %v233
      %v264 = vpack.c.bf16 %v236, %v235
      %v265 = vpack.c.bf16 %v238, %v237
      %v266 = vpack.c.bf16 %v240, %v239
      %v267 = vpack.c.bf16 %v242, %v241
      %v268 = vpack.c.bf16 %v244, %v243
      %v269 = vpack.c.bf16 %v246, %v245
      %v270 = vpack.c.bf16 %v248, %v247
      %v271 = vpack.c.bf16 %v250, %v249
      %v272 = vpack.c.bf16 %v252, %v251
      %v273 = vpack.c.bf16 %v254, %v253
      %v274 = vpack.c.bf16 %v256, %v255
      %v275 = vpack.c.bf16 %v258, %v257
      %v276 = vpack.c.bf16 %v260, %v259
      %v277 = vld [vmem:[%s1] sm:$0xf]
      %v278 = vld [vmem:[%s1 + $0x4] sm:$0xf]
      %v279 = vld [vmem:[%s2] sm:$0x1]
      %v281 = vlaneseq
      %v282 = vshrl.u32 %v281, 7
      %v283 = vsub.s32 0, %v282
      %v284 = vrot.slane %v279, %v283
      %v288 = vunpack.c.l.b16 %v277
      %v289 = vunpack.c.l.b16 %v278
      %v290 = vpack.c.b16 %v289, %v288
      %vm292 = vcmask 130048
      %v294 = vsel %vm292, %v261, 0
      %v297 = vsel %vm292, %v262, 0
      %v300 = vsel %vm292, %v263, 0
      %v303 = vsel %vm292, %v264, 0
      %v306 = vsel %vm292, %v265, 0
      %v309 = vsel %vm292, %v266, 0
      %v312 = vsel %vm292, %v267, 0
      %v315 = vsel %vm292, %v268, 0
      %v318 = vsel %vm292, %v269, 0
      %v321 = vsel %vm292, %v270, 0
      %v324 = vsel %vm292, %v271, 0
      %v327 = vsel %vm292, %v272, 0
      %v330 = vsel %vm292, %v273, 0
      %v333 = vsel %vm292, %v274, 0
      %v336 = vsel %vm292, %v275, 0
      %v339 = vsel %vm292, %v276, 0
      %341 = vmatprep.subr.bf16.mxu0 0
      %342 = vmatpush1.bf16.msra.mxu0 0
      %343 = vmatprep.subr.bf16.mxu0 0
      %344 = vmatpush1.bf16.msra.mxu0 0
      %345 = vmatprep.subr.bf16.mxu0 0
      %346 = vmatpush1.bf16.msra.mxu0 0
      %347 = vmatprep.subr.bf16.mxu0 0
      %348 = vmatpush1.bf16.msra.mxu0 0
      %349 = vmatprep.subr.bf16.mxu0 0
      %350 = vmatpush1.bf16.msra.mxu0 0
      %351 = vmatprep.subr.bf16.mxu0 0
      %352 = vmatpush1.bf16.msra.mxu0 0
      %353 = vmatprep.subr.bf16.mxu0 0
      %354 = vmatpush1.bf16.msra.mxu0 0
      %355 = vmatprep.subr.bf16.mxu0 0
      %356 = vmatpush1.bf16.msra.mxu0 %v290
      %357 = vmatprep.subr.bf16.mxu0 0
      %358 = vmatpush2.bf16.msra.mxu0 0
      %359 = vmatprep.subr.bf16.mxu0 0
      %360 = vmatpush2.bf16.msra.mxu0 0
      %361 = vmatprep.subr.bf16.mxu0 0
      %362 = vmatpush2.bf16.msra.mxu0 0
      %363 = vmatprep.subr.bf16.mxu0 0
      %364 = vmatpush2.bf16.msra.mxu0 0
      %365 = vmatprep.subr.bf16.mxu0 0
      %366 = vmatpush2.bf16.msra.mxu0 0
      %367 = vmatprep.subr.bf16.mxu0 0
      %368 = vmatpush2.bf16.msra.mxu0 0
      %369 = vmatprep.subr.bf16.mxu0 0
      %370 = vmatpush2.bf16.msra.mxu0 0
      %371 = vmatprep.subr.bf16.mxu0 0
      %372 = vmatpush2.bf16.msra.mxu0 0
      %373 = vmatprep.mubr.bf16.mxu0 0
      %374 = vmatmul.mubr.bf16.gmra.mxu0 %v294
      %v375 = vpop.f32.mrf.mxu0
      %v376 = vadd.f32 %v284, %v375
      %v377 = vpop.f32.mrf.mxu0
      %v378 = vpop.f32.mrf.mxu0
      %v379 = vadd.f32 %v284, %v378
      %v380 = vpop.f32.mrf.mxu0
      %381 = vmatprep.mubr.bf16.mxu0 0
      %382 = vmatmul.mubr.bf16.gmra.mxu0 %v297
      %v383 = vpop.f32.mrf.mxu0
      %v384 = vadd.f32 %v284, %v383
      %v385 = vpop.f32.mrf.mxu0
      %v386 = vpop.f32.mrf.mxu0
      %v387 = vadd.f32 %v284, %v386
      %v388 = vpop.f32.mrf.mxu0
      %389 = vmatprep.mubr.bf16.mxu0 0
      %390 = vmatmul.mubr.bf16.gmra.mxu0 %v300
      %v391 = vpop.f32.mrf.mxu0
      %v392 = vadd.f32 %v284, %v391
      %v393 = vpop.f32.mrf.mxu0
      %v394 = vpop.f32.mrf.mxu0
      %v395 = vadd.f32 %v284, %v394
      %v396 = vpop.f32.mrf.mxu0
      %397 = vmatprep.mubr.bf16.mxu0 0
      %398 = vmatmul.mubr.bf16.gmra.mxu0 %v303
      %v399 = vpop.f32.mrf.mxu0
      %v400 = vadd.f32 %v284, %v399
      %v401 = vpop.f32.mrf.mxu0
      %v402 = vpop.f32.mrf.mxu0
      %v403 = vadd.f32 %v284, %v402
      %v404 = vpop.f32.mrf.mxu0
      %405 = vmatprep.mubr.bf16.mxu0 0
      %406 = vmatmul.mubr.bf16.gmra.mxu0 %v306
      %v407 = vpop.f32.mrf.mxu0
      %v408 = vadd.f32 %v284, %v407
      %v409 = vpop.f32.mrf.mxu0
      %v410 = vpop.f32.mrf.mxu0
      %v411 = vadd.f32 %v284, %v410
      %v412 = vpop.f32.mrf.mxu0
      %413 = vmatprep.mubr.bf16.mxu0 0
      %414 = vmatmul.mubr.bf16.gmra.mxu0 %v309
      %v415 = vpop.f32.mrf.mxu0
      %v416 = vadd.f32 %v284, %v415
      %v417 = vpop.f32.mrf.mxu0
      %v418 = vpop.f32.mrf.mxu0
      %v419 = vadd.f32 %v284, %v418
      %v420 = vpop.f32.mrf.mxu0
      %421 = vmatprep.mubr.bf16.mxu0 0
      %422 = vmatmul.mubr.bf16.gmra.mxu0 %v312
      %v423 = vpop.f32.mrf.mxu0
      %v424 = vadd.f32 %v284, %v423
      %v425 = vpop.f32.mrf.mxu0
      %v426 = vpop.f32.mrf.mxu0
      %v427 = vadd.f32 %v284, %v426
      %v428 = vpop.f32.mrf.mxu0
      %429 = vmatprep.mubr.bf16.mxu0 0
      %430 = vmatmul.mubr.bf16.gmra.mxu0 %v315
      %v431 = vpop.f32.mrf.mxu0
      %v432 = vadd.f32 %v284, %v431
      %v433 = vpop.f32.mrf.mxu0
      %v434 = vpop.f32.mrf.mxu0
      %v435 = vadd.f32 %v284, %v434
      %v436 = vpop.f32.mrf.mxu0
      %437 = vmatprep.mubr.bf16.mxu0 0
      %438 = vmatmul.mubr.bf16.gmra.mxu0 %v318
      %v439 = vpop.f32.mrf.mxu0
      %v440 = vadd.f32 %v284, %v439
      %v441 = vpop.f32.mrf.mxu0
      %v442 = vpop.f32.mrf.mxu0
      %v443 = vadd.f32 %v284, %v442
      %v444 = vpop.f32.mrf.mxu0
      %445 = vmatprep.mubr.bf16.mxu0 0
      %446 = vmatmul.mubr.bf16.gmra.mxu0 %v321
      %v447 = vpop.f32.mrf.mxu0
      %v448 = vadd.f32 %v284, %v447
      %v449 = vpop.f32.mrf.mxu0
      %v450 = vpop.f32.mrf.mxu0
      %v451 = vadd.f32 %v284, %v450
      %v452 = vpop.f32.mrf.mxu0
      %453 = vmatprep.mubr.bf16.mxu0 0
      %454 = vmatmul.mubr.bf16.gmra.mxu0 %v324
      %v455 = vpop.f32.mrf.mxu0
      %v456 = vadd.f32 %v284, %v455
      %v457 = vpop.f32.mrf.mxu0
      %v458 = vpop.f32.mrf.mxu0
      %v459 = vadd.f32 %v284, %v458
      %v460 = vpop.f32.mrf.mxu0
      %461 = vmatprep.mubr.bf16.mxu0 0
      %462 = vmatmul.mubr.bf16.gmra.mxu0 %v327
      %v463 = vpop.f32.mrf.mxu0
      %v464 = vadd.f32 %v284, %v463
      %v465 = vpop.f32.mrf.mxu0
      %v466 = vpop.f32.mrf.mxu0
      %v467 = vadd.f32 %v284, %v466
      %v468 = vpop.f32.mrf.mxu0
      %469 = vmatprep.mubr.bf16.mxu0 0
      %470 = vmatmul.mubr.bf16.gmra.mxu0 %v330
      %v471 = vpop.f32.mrf.mxu0
      %v472 = vadd.f32 %v284, %v471
      %v473 = vpop.f32.mrf.mxu0
      %v474 = vpop.f32.mrf.mxu0
      %v475 = vadd.f32 %v284, %v474
      %v476 = vpop.f32.mrf.mxu0
      %477 = vmatprep.mubr.bf16.mxu0 0
      %478 = vmatmul.mubr.bf16.gmra.mxu0 %v333
      %v479 = vpop.f32.mrf.mxu0
      %v480 = vadd.f32 %v284, %v479
      %v481 = vpop.f32.mrf.mxu0
      %v482 = vpop.f32.mrf.mxu0
      %v483 = vadd.f32 %v284, %v482
      %v484 = vpop.f32.mrf.mxu0
      %485 = vmatprep.mubr.bf16.mxu0 0
      %486 = vmatmul.mubr.bf16.gmra.mxu0 %v336
      %v487 = vpop.f32.mrf.mxu0
      %v488 = vadd.f32 %v284, %v487
      %v489 = vpop.f32.mrf.mxu0
      %v490 = vpop.f32.mrf.mxu0
      %v491 = vadd.f32 %v284, %v490
      %v492 = vpop.f32.mrf.mxu0
      %493 = vmatprep.mubr.bf16.mxu0 0
      %494 = vmatmul.mubr.bf16.gmra.mxu0 %v339
      %v495 = vpop.f32.mrf.mxu0
      %v496 = vadd.f32 %v284, %v495
      %v497 = vpop.f32.mrf.mxu0
      %v498 = vpop.f32.mrf.mxu0
      %v499 = vadd.f32 %v284, %v498
      %v500 = vpop.f32.mrf.mxu0
      %501 = vdwg.mxu0
      %v502 = vtanh.pop %v376
      %v503 = vtanh.pop %v379
      %v504 = vtanh.pop %v384
      %v505 = vtanh.pop %v387
      %v506 = vtanh.pop %v392
      %v507 = vtanh.pop %v395
      %v508 = vtanh.pop %v400
      %v509 = vtanh.pop %v403
      %v510 = vtanh.pop %v408
      %v511 = vtanh.pop %v411
      %v512 = vtanh.pop %v416
      %v513 = vtanh.pop %v419
      %v514 = vtanh.pop %v424
      %v515 = vtanh.pop %v427
      %v516 = vtanh.pop %v432
      %v517 = vtanh.pop %v435
      %v518 = vtanh.pop %v440
      %v519 = vtanh.pop %v443
      %v520 = vtanh.pop %v448
      %v521 = vtanh.pop %v451
      %v522 = vtanh.pop %v456
      %v523 = vtanh.pop %v459
      %v524 = vtanh.pop %v464
      %v525 = vtanh.pop %v467
      %v526 = vtanh.pop %v472
      %v527 = vtanh.pop %v475
      %v528 = vtanh.pop %v480
      %v529 = vtanh.pop %v483
      %v530 = vtanh.pop %v488
      %v531 = vtanh.pop %v491
      %v532 = vtanh.pop %v496
      %v533 = vtanh.pop %v499
      %v534 = vpack.c.bf16 %v503, %v502
      %v535 = vpack.c.bf16 %v505, %v504
      %v536 = vpack.c.bf16 %v507, %v506
      %v537 = vpack.c.bf16 %v509, %v508
      %v538 = vpack.c.bf16 %v511, %v510
      %v539 = vpack.c.bf16 %v513, %v512
      %v540 = vpack.c.bf16 %v515, %v514
      %v541 = vpack.c.bf16 %v517, %v516
      %v542 = vpack.c.bf16 %v519, %v518
      %v543 = vpack.c.bf16 %v521, %v520
      %v544 = vpack.c.bf16 %v523, %v522
      %v545 = vpack.c.bf16 %v525, %v524
      %v546 = vpack.c.bf16 %v527, %v526
      %v547 = vpack.c.bf16 %v529, %v528
      %v548 = vpack.c.bf16 %v531, %v530
      %v549 = vpack.c.bf16 %v533, %v532
      %v550 = vld [vmem:[%s3] sm:$0xf]
      %v551 = vld [vmem:[%s3 + $0x4] sm:$0xf]
      %v552 = vld [vmem:[%s3 + $0x8] sm:$0xf]
      %v553 = vld [vmem:[%s3 + $0xc] sm:$0xf]
      %v554 = vld [vmem:[%s3 + $0x10] sm:$0xf]
      %v555 = vld [vmem:[%s3 + $0x14] sm:$0xf]
      %v556 = vld [vmem:[%s3 + $0x18] sm:$0xf]
      %v557 = vld [vmem:[%s3 + $0x1c] sm:$0xf]
      %v558 = vld [vmem:[%s3 + $0x20] sm:$0xf]
      %v559 = vld [vmem:[%s3 + $0x24] sm:$0xf]
      %v560 = vld [vmem:[%s3 + $0x28] sm:$0xf]
      %v561 = vld [vmem:[%s3 + $0x2c] sm:$0xf]
      %v562 = vld [vmem:[%s3 + $0x30] sm:$0xf]
      %v563 = vld [vmem:[%s3 + $0x34] sm:$0xf]
      %v564 = vld [vmem:[%s3 + $0x38] sm:$0xf]
      %v565 = vld [vmem:[%s3 + $0x3c] sm:$0xf]
      %v566 = vld [vmem:[%s4] sm:$0x1]
      %v568 = vlaneseq
      %v569 = vshrl.u32 %v568, 7
      %v570 = vsub.s32 0, %v569
      %v571 = vrot.slane %v566, %v570
      %v589 = vunpack.c.l.b16 %v550
      %v590 = vunpack.c.l.b16 %v551
      %v591 = vunpack.c.l.b16 %v552
      %v592 = vunpack.c.l.b16 %v553
      %v593 = vunpack.c.l.b16 %v554
      %v594 = vunpack.c.l.b16 %v555
      %v595 = vunpack.c.l.b16 %v556
      %v596 = vunpack.c.l.b16 %v557
      %v597 = vunpack.c.l.b16 %v558
      %v598 = vunpack.c.l.b16 %v559
      %v599 = vunpack.c.l.b16 %v560
      %v600 = vunpack.c.l.b16 %v561
      %v601 = vunpack.c.l.b16 %v562
      %v602 = vunpack.c.l.b16 %v563
      %v603 = vunpack.c.l.b16 %v564
      %v604 = vunpack.c.l.b16 %v565
      %v605 = vpack.c.b16 %v590, %v589
      %v606 = vpack.c.b16 %v592, %v591
      %v607 = vpack.c.b16 %v594, %v593
      %v608 = vpack.c.b16 %v596, %v595
      %v609 = vpack.c.b16 %v598, %v597
      %v610 = vpack.c.b16 %v600, %v599
      %v611 = vpack.c.b16 %v602, %v601
      %v612 = vpack.c.b16 %v604, %v603
      %621 = vmatprep.subr.bf16.mxu0 0
      %622 = vmatpush1.bf16.msra.mxu0 %v612
      %623 = vmatprep.subr.bf16.mxu0 0
      %624 = vmatpush1.bf16.msra.mxu0 %v611
      %625 = vmatprep.subr.bf16.mxu0 0
      %626 = vmatpush1.bf16.msra.mxu0 %v610
      %627 = vmatprep.subr.bf16.mxu0 0
      %628 = vmatpush1.bf16.msra.mxu0 %v609
      %629 = vmatprep.subr.bf16.mxu0 0
      %630 = vmatpush1.bf16.msra.mxu0 %v608
      %631 = vmatprep.subr.bf16.mxu0 0
      %632 = vmatpush1.bf16.msra.mxu0 %v607
      %633 = vmatprep.subr.bf16.mxu0 0
      %634 = vmatpush1.bf16.msra.mxu0 %v606
      %635 = vmatprep.subr.bf16.mxu0 0
      %636 = vmatpush1.bf16.msra.mxu0 %v605
      %637 = vmatprep.subr.bf16.mxu0 0
      %638 = vmatpush2.bf16.msra.mxu0 0
      %639 = vmatprep.subr.bf16.mxu0 0
      %640 = vmatpush2.bf16.msra.mxu0 0
      %641 = vmatprep.subr.bf16.mxu0 0
      %642 = vmatpush2.bf16.msra.mxu0 0
      %643 = vmatprep.subr.bf16.mxu0 0
      %644 = vmatpush2.bf16.msra.mxu0 0
      %645 = vmatprep.subr.bf16.mxu0 0
      %646 = vmatpush2.bf16.msra.mxu0 0
      %647 = vmatprep.subr.bf16.mxu0 0
      %648 = vmatpush2.bf16.msra.mxu0 0
      %649 = vmatprep.subr.bf16.mxu0 0
      %650 = vmatpush2.bf16.msra.mxu0 0
      %651 = vmatprep.subr.bf16.mxu0 0
      %652 = vmatpush2.bf16.msra.mxu0 0
      %653 = vmatprep.mubr.bf16.mxu0 0
      %654 = vmatmul.mubr.bf16.gmra.mxu0 %v534
      %v655 = vpop.f32.mrf.mxu0
      %v656 = vadd.f32 %v571, %v655
      %v657 = vpop.f32.mrf.mxu0
      %v658 = vpop.f32.mrf.mxu0
      %v659 = vadd.f32 %v571, %v658
      %v660 = vpop.f32.mrf.mxu0
      %661 = vmatprep.mubr.bf16.mxu0 0
      %662 = vmatmul.mubr.bf16.gmra.mxu0 %v535
      %v663 = vpop.f32.mrf.mxu0
      %v664 = vadd.f32 %v571, %v663
      %v665 = vpop.f32.mrf.mxu0
      %v666 = vpop.f32.mrf.mxu0
      %v667 = vadd.f32 %v571, %v666
      %v668 = vpop.f32.mrf.mxu0
      %669 = vmatprep.mubr.bf16.mxu0 0
      %670 = vmatmul.mubr.bf16.gmra.mxu0 %v536
      %v671 = vpop.f32.mrf.mxu0
      %v672 = vadd.f32 %v571, %v671
      %v673 = vpop.f32.mrf.mxu0
      %v674 = vpop.f32.mrf.mxu0
      %v675 = vadd.f32 %v571, %v674
      %v676 = vpop.f32.mrf.mxu0
      %677 = vmatprep.mubr.bf16.mxu0 0
      %678 = vmatmul.mubr.bf16.gmra.mxu0 %v537
      %v679 = vpop.f32.mrf.mxu0
      %v680 = vadd.f32 %v571, %v679
      %v681 = vpop.f32.mrf.mxu0
      %v682 = vpop.f32.mrf.mxu0
      %v683 = vadd.f32 %v571, %v682
      %v684 = vpop.f32.mrf.mxu0
      %685 = vmatprep.mubr.bf16.mxu0 0
      %686 = vmatmul.mubr.bf16.gmra.mxu0 %v538
      %v687 = vpop.f32.mrf.mxu0
      %v688 = vadd.f32 %v571, %v687
      %v689 = vpop.f32.mrf.mxu0
      %v690 = vpop.f32.mrf.mxu0
      %v691 = vadd.f32 %v571, %v690
      %v692 = vpop.f32.mrf.mxu0
      %693 = vmatprep.mubr.bf16.mxu0 0
      %694 = vmatmul.mubr.bf16.gmra.mxu0 %v539
      %v695 = vpop.f32.mrf.mxu0
      %v696 = vadd.f32 %v571, %v695
      %v697 = vpop.f32.mrf.mxu0
      %v698 = vpop.f32.mrf.mxu0
      %v699 = vadd.f32 %v571, %v698
      %v700 = vpop.f32.mrf.mxu0
      %701 = vmatprep.mubr.bf16.mxu0 0
      %702 = vmatmul.mubr.bf16.gmra.mxu0 %v540
      %v703 = vpop.f32.mrf.mxu0
      %v704 = vadd.f32 %v571, %v703
      %v705 = vpop.f32.mrf.mxu0
      %v706 = vpop.f32.mrf.mxu0
      %v707 = vadd.f32 %v571, %v706
      %v708 = vpop.f32.mrf.mxu0
      %709 = vmatprep.mubr.bf16.mxu0 0
      %710 = vmatmul.mubr.bf16.gmra.mxu0 %v541
      %v711 = vpop.f32.mrf.mxu0
      %v712 = vadd.f32 %v571, %v711
      %v713 = vpop.f32.mrf.mxu0
      %v714 = vpop.f32.mrf.mxu0
      %v715 = vadd.f32 %v571, %v714
      %v716 = vpop.f32.mrf.mxu0
      %717 = vmatprep.mubr.bf16.mxu0 0
      %718 = vmatmul.mubr.bf16.gmra.mxu0 %v542
      %v719 = vpop.f32.mrf.mxu0
      %v720 = vadd.f32 %v571, %v719
      %v721 = vpop.f32.mrf.mxu0
      %v722 = vpop.f32.mrf.mxu0
      %v723 = vadd.f32 %v571, %v722
      %v724 = vpop.f32.mrf.mxu0
      %725 = vmatprep.mubr.bf16.mxu0 0
      %726 = vmatmul.mubr.bf16.gmra.mxu0 %v543
      %v727 = vpop.f32.mrf.mxu0
      %v728 = vadd.f32 %v571, %v727
      %v729 = vpop.f32.mrf.mxu0
      %v730 = vpop.f32.mrf.mxu0
      %v731 = vadd.f32 %v571, %v730
      %v732 = vpop.f32.mrf.mxu0
      %733 = vmatprep.mubr.bf16.mxu0 0
      %734 = vmatmul.mubr.bf16.gmra.mxu0 %v544
      %v735 = vpop.f32.mrf.mxu0
      %v736 = vadd.f32 %v571, %v735
      %v737 = vpop.f32.mrf.mxu0
      %v738 = vpop.f32.mrf.mxu0
      %v739 = vadd.f32 %v571, %v738
      %v740 = vpop.f32.mrf.mxu0
      %741 = vmatprep.mubr.bf16.mxu0 0
      %742 = vmatmul.mubr.bf16.gmra.mxu0 %v545
      %v743 = vpop.f32.mrf.mxu0
      %v744 = vadd.f32 %v571, %v743
      %v745 = vpop.f32.mrf.mxu0
      %v746 = vpop.f32.mrf.mxu0
      %v747 = vadd.f32 %v571, %v746
      %v748 = vpop.f32.mrf.mxu0
      %749 = vmatprep.mubr.bf16.mxu0 0
      %750 = vmatmul.mubr.bf16.gmra.mxu0 %v546
      %v751 = vpop.f32.mrf.mxu0
      %v752 = vadd.f32 %v571, %v751
      %v753 = vpop.f32.mrf.mxu0
      %v754 = vpop.f32.mrf.mxu0
      %v755 = vadd.f32 %v571, %v754
      %v756 = vpop.f32.mrf.mxu0
      %757 = vmatprep.mubr.bf16.mxu0 0
      %758 = vmatmul.mubr.bf16.gmra.mxu0 %v547
      %v759 = vpop.f32.mrf.mxu0
      %v760 = vadd.f32 %v571, %v759
      %v761 = vpop.f32.mrf.mxu0
      %v762 = vpop.f32.mrf.mxu0
      %v763 = vadd.f32 %v571, %v762
      %v764 = vpop.f32.mrf.mxu0
      %765 = vmatprep.mubr.bf16.mxu0 0
      %766 = vmatmul.mubr.bf16.gmra.mxu0 %v548
      %v767 = vpop.f32.mrf.mxu0
      %v768 = vadd.f32 %v571, %v767
      %v769 = vpop.f32.mrf.mxu0
      %v770 = vpop.f32.mrf.mxu0
      %v771 = vadd.f32 %v571, %v770
      %v772 = vpop.f32.mrf.mxu0
      %773 = vmatprep.mubr.bf16.mxu0 0
      %774 = vmatmul.mubr.bf16.gmra.mxu0 %v549
      %v775 = vpop.f32.mrf.mxu0
      %v776 = vadd.f32 %v571, %v775
      %v777 = vpop.f32.mrf.mxu0
      %v778 = vpop.f32.mrf.mxu0
      %v779 = vadd.f32 %v571, %v778
      %v780 = vpop.f32.mrf.mxu0
      %781 = vdwg.mxu0
      %v782 = vtanh.pop %v656
      %v783 = vtanh.pop %v659
      %v784 = vtanh.pop %v664
      %v785 = vtanh.pop %v667
      %v786 = vtanh.pop %v672
      %v787 = vtanh.pop %v675
      %v788 = vtanh.pop %v680
      %v789 = vtanh.pop %v683
      %v790 = vtanh.pop %v688
      %v791 = vtanh.pop %v691
      %v792 = vtanh.pop %v696
      %v793 = vtanh.pop %v699
      %v794 = vtanh.pop %v704
      %v795 = vtanh.pop %v707
      %v796 = vtanh.pop %v712
      %v797 = vtanh.pop %v715
      %v798 = vtanh.pop %v720
      %v799 = vtanh.pop %v723
      %v800 = vtanh.pop %v728
      %v801 = vtanh.pop %v731
      %v802 = vtanh.pop %v736
      %v803 = vtanh.pop %v739
      %v804 = vtanh.pop %v744
      %v805 = vtanh.pop %v747
      %v806 = vtanh.pop %v752
      %v807 = vtanh.pop %v755
      %v808 = vtanh.pop %v760
      %v809 = vtanh.pop %v763
      %v810 = vtanh.pop %v768
      %v811 = vtanh.pop %v771
      %v812 = vtanh.pop %v776
      %v813 = vtanh.pop %v779
      %v814 = vadd.f32 %v782, %v376
      %v815 = vadd.f32 %v783, %v379
      %v816 = vadd.f32 %v784, %v384
      %v817 = vadd.f32 %v785, %v387
      %v818 = vadd.f32 %v786, %v392
      %v819 = vadd.f32 %v787, %v395
      %v820 = vadd.f32 %v788, %v400
      %v821 = vadd.f32 %v789, %v403
      %v822 = vadd.f32 %v790, %v408
      %v823 = vadd.f32 %v791, %v411
      %v824 = vadd.f32 %v792, %v416
      %v825 = vadd.f32 %v793, %v419
      %v826 = vadd.f32 %v794, %v424
      %v827 = vadd.f32 %v795, %v427
      %v828 = vadd.f32 %v796, %v432
      %v829 = vadd.f32 %v797, %v435
      %v830 = vadd.f32 %v798, %v440
      %v831 = vadd.f32 %v799, %v443
      %v832 = vadd.f32 %v800, %v448
      %v833 = vadd.f32 %v801, %v451
      %v834 = vadd.f32 %v802, %v456
      %v835 = vadd.f32 %v803, %v459
      %v836 = vadd.f32 %v804, %v464
      %v837 = vadd.f32 %v805, %v467
      %v838 = vadd.f32 %v806, %v472
      %v839 = vadd.f32 %v807, %v475
      %v840 = vadd.f32 %v808, %v480
      %v841 = vadd.f32 %v809, %v483
      %v842 = vadd.f32 %v810, %v488
      %v843 = vadd.f32 %v811, %v491
      %v844 = vadd.f32 %v812, %v496
      %v845 = vadd.f32 %v813, %v499
      %vm846 = vcmask 261120
      %847 = vst.msk [vmem:[%s226] sm:$0xff] %vm846, %v814
      %848 = vst.msk [vmem:[%s226 + $0x8] sm:$0xff] %vm846, %v815
      %849 = vst.msk [vmem:[%s226 + $0x10] sm:$0xff] %vm846, %v816
      %850 = vst.msk [vmem:[%s226 + $0x18] sm:$0xff] %vm846, %v817
      %851 = vst.msk [vmem:[%s226 + $0x20] sm:$0xff] %vm846, %v818
      %852 = vst.msk [vmem:[%s226 + $0x28] sm:$0xff] %vm846, %v819
      %853 = vst.msk [vmem:[%s226 + $0x30] sm:$0xff] %vm846, %v820
      %854 = vst.msk [vmem:[%s226 + $0x38] sm:$0xff] %vm846, %v821
      %855 = vst.msk [vmem:[%s226 + $0x40] sm:$0xff] %vm846, %v822
      %856 = vst.msk [vmem:[%s226 + $0x48] sm:$0xff] %vm846, %v823
      %857 = vst.msk [vmem:[%s226 + $0x50] sm:$0xff] %vm846, %v824
      %858 = vst.msk [vmem:[%s226 + $0x58] sm:$0xff] %vm846, %v825
      %859 = vst.msk [vmem:[%s226 + $0x60] sm:$0xff] %vm846, %v826
      %860 = vst.msk [vmem:[%s226 + $0x68] sm:$0xff] %vm846, %v827
      %861 = vst.msk [vmem:[%s226 + $0x70] sm:$0xff] %vm846, %v828
      %862 = vst.msk [vmem:[%s226 + $0x78] sm:$0xff] %vm846, %v829
      %863 = vst.msk [vmem:[%s226 + $0x80] sm:$0xff] %vm846, %v830
      %864 = vst.msk [vmem:[%s226 + $0x88] sm:$0xff] %vm846, %v831
      %865 = vst.msk [vmem:[%s226 + $0x90] sm:$0xff] %vm846, %v832
      %866 = vst.msk [vmem:[%s226 + $0x98] sm:$0xff] %vm846, %v833
      %867 = vst.msk [vmem:[%s226 + $0xa0] sm:$0xff] %vm846, %v834
      %868 = vst.msk [vmem:[%s226 + $0xa8] sm:$0xff] %vm846, %v835
      %869 = vst.msk [vmem:[%s226 + $0xb0] sm:$0xff] %vm846, %v836
      %870 = vst.msk [vmem:[%s226 + $0xb8] sm:$0xff] %vm846, %v837
      %871 = vst.msk [vmem:[%s226 + $0xc0] sm:$0xff] %vm846, %v838
      %872 = vst.msk [vmem:[%s226 + $0xc8] sm:$0xff] %vm846, %v839
      %873 = vst.msk [vmem:[%s226 + $0xd0] sm:$0xff] %vm846, %v840
      %874 = vst.msk [vmem:[%s226 + $0xd8] sm:$0xff] %vm846, %v841
      %875 = vst.msk [vmem:[%s226 + $0xe0] sm:$0xff] %vm846, %v842
      %876 = vst.msk [vmem:[%s226 + $0xe8] sm:$0xff] %vm846, %v843
      %877 = vst.msk [vmem:[%s226 + $0xf0] sm:$0xff] %vm846, %v844
      %878 = vst.msk [vmem:[%s226 + $0xf8] sm:$0xff] %vm846, %v845
      %s879 = smul.u32 32, %s16
      %p880 = scmp.lt.s32.totalorder %s879, 255
      %s881 = scalar_select %p880, %s879, 255
      %s882 = smul.addr %s881, 8
      %s883 = scalar_lea.vmem %s5, %s882
      // Predicated region
      $region41: #{siml_block_forward.1} parent=39 // pred_check
        %p884 = pneg %p144
      $region42: #{siml_block_forward.1} parent=39 // pred_check_branch
        %886 = sbr.rel (%p884) target = $region44
      $region43: #{siml_block_forward.1} parent=39 // pred_region
        %s887 = smul.u32 32, %s16
      $region44: #{siml_block_forward.1} parent=39 // pred_fallthru
        _
    $region40: #{siml_block_forward.1} parent=5 // pred_fallthru
      _
    %p888 = scmp.le.s32.totalorder 2, %s11
    // Predicated region
    $region45: #{siml_block_forward.1} parent=5 // pred_check
      %p889 = pneg %p888
    $region46: #{siml_block_forward.1} parent=5 // pred_check_branch
      %891 = sbr.rel (%p889) target = $region48
    $region47: #{siml_block_forward.1} parent=5 // pred_region
      %s892 = ssub.s32 %s11, 2
      // Predicated region
      $region49: #{siml_block_forward.1} parent=47 // pred_check
        %p893 = pneg %p150
      $region50: #{siml_block_forward.1} parent=47 // pred_check_branch
        %895 = sbr.rel (%p893) target = $region52
      $region51: #{siml_block_forward.1} parent=47 // pred_region
        %s896 = smul.u32 32, %s17
        %p897 = scmp.lt.s32.totalorder %s896, 255
        %s898 = scalar_select %p897, %s896, 255
        %s899 = smul.addr %s898, 8
        %s900 = scalar_lea.vmem %s5, %s899
      $region52: #{siml_block_forward.1} parent=47 // pred_fallthru
        _
    $region48: #{siml_block_forward.1} parent=5 // pred_fallthru
      _
  $region6: #{siml_block_forward.1} parent=0 // loop_footer
    %s15 = sadd.s32 1, %s11
  $region7: #{siml_block_forward.1} parent=0 // loop_footer_branch
    %10 = sbr.rel target = $region3
  $region8: #{siml_block_forward.1} parent=0 // loop_exit
    _

</llo_original>
